<compile_context>
chip_gen: v5e
topology: v5e:2x2
jax: 0.10.0
libtpu: 0.0.40
codegen_flags: <defaults>
</compile_context>

<pallas_src>
import functools

import jax
import jax.numpy as jnp
from jax.experimental import pallas as pl
from jax.experimental.pallas import tpu as pltpu


def _round_up(x: int, m: int) -> int:
    return ((x + m - 1) // m) * m


def critic_mlp_kernel(x_ref, w1_ref, b1_ref, w2_ref, b2_ref, w3_ref, b3_ref,
                      q_ref):
    """Fused 3-layer value MLP for one batch tile.

    x_ref : (TB, D)       activations tile (streamed per grid step)
    w*_ref: weight blocks (VMEM-resident across the grid, constant index_map)
    w3_ref: (1, H2)       final layer as a row -> VPU mul + lane reduce
    b3_ref: (1, 1) SMEM   scalar bias of the value head
    q_ref : (TB, 1)       output tile
    """
    cdt = w1_ref.dtype  # compute dtype for the MXU (f32 or bf16)

    # Layer 1: (TB, D) @ (D, H1) + b1, ReLU.  Accumulate + elementwise in f32.
    h1 = jnp.dot(x_ref[...].astype(cdt), w1_ref[...],
                 preferred_element_type=jnp.float32)
    h1 = jnp.maximum(h1 + b1_ref[...].astype(jnp.float32), 0.0)

    # Layer 2: (TB, H1) @ (H1, H2) + b2, ReLU.
    h2 = jnp.dot(h1.astype(cdt), w2_ref[...],
                 preferred_element_type=jnp.float32)
    h2 = jnp.maximum(h2 + b2_ref[...].astype(jnp.float32), 0.0)

    # Output head (out_features = 1): avoid an N=1 MXU matmul; use a VPU
    # broadcast-multiply and an XLU lane reduction instead.
    q = jnp.sum(h2 * w3_ref[...].astype(jnp.float32), axis=-1, keepdims=True)
    q_ref[...] = (q + b3_ref[0, 0]).astype(q_ref.dtype)


@functools.partial(jax.jit, static_argnames=("block_batch",))
def base_critic_forward(state, params, *, block_batch: int = 256):
    """BaseCritic.forward(state) -> q, shape (batch, 1)."""
    w1, b1, w2, b2, w3_row, b3 = params
    batch, obs_dim = state.shape
    h1 = w1.shape[1]
    h2 = w2.shape[1]

    # Batch tile: multiple of 8 (f32 sublane), capped at block_batch rows.
    tb = min(block_batch, _round_up(batch, 8))
    padded = _round_up(batch, tb)
    if padded != batch:
        state = jnp.pad(state, ((0, padded - batch), (0, 0)))
    grid = (padded // tb,)

    resident = lambda shape: pl.BlockSpec(shape, lambda i: (0, 0))

    q = pl.pallas_call(
        critic_mlp_kernel,
        out_shape=jax.ShapeDtypeStruct((padded, 1), jnp.float32),
        grid=grid,
        in_specs=[
            pl.BlockSpec((tb, obs_dim), lambda i: (i, 0)),   # streamed x tile
            resident((obs_dim, h1)),                         # w1
            resident((1, h1)),                               # b1
            resident((h1, h2)),                              # w2
            resident((1, h2)),                               # b2
            resident((1, h2)),                               # w3 as a row
            pl.BlockSpec(memory_space=pltpu.MemorySpace.SMEM),  # b3 scalar
        ],
        out_specs=pl.BlockSpec((tb, 1), lambda i: (i, 0)),
        compiler_params=pltpu.CompilerParams(
            dimension_semantics=("parallel",)),
    )(state, w1, b1, w2, b2, w3_row, b3)

    if padded != batch:
        q = q[:batch]
    return q


def init_params(key, obs_dim, h1, h2, dtype=jnp.float32):
    """torch.nn.Linear-style init: U(-k, k), k = 1/sqrt(fan_in).

    Weights are stored as (in_features, out_features) so the kernel does
    x @ W + b; the final layer is stored as a (1, H2) row (VPU head).
    Use dtype=jnp.bfloat16 on v6e/v7x to halve weight/activation HBM traffic.
    """
    ks = jax.random.split(key, 6)

    def lin(kw, kb, fan_in, fan_out):
        bound = 1.0 / jnp.sqrt(fan_in)
        w = jax.random.uniform(kw, (fan_in, fan_out), jnp.float32, -bound,
                               bound).astype(dtype)
        b = jax.random.uniform(kb, (1, fan_out), jnp.float32, -bound,
                               bound).astype(dtype)
        return w, b

    w1, b1 = lin(ks[0], ks[1], obs_dim, h1)
    w2, b2 = lin(ks[2], ks[3], h1, h2)
    w3, b3 = lin(ks[4], ks[5], h2, 1)
    w3_row = w3.reshape(1, h2)               # (1, H2) row for the VPU head
    b3 = b3.reshape(1, 1).astype(jnp.float32)  # scalar bias, kept f32 (SMEM)
    return (w1, b1, w2, b2, w3_row, b3)


def reference_forward(state, params):
    w1, b1, w2, b2, w3_row, b3 = params
    f32 = jnp.float32
    h1 = jnp.maximum(state.astype(f32) @ w1.astype(f32) + b1.astype(f32), 0.0)
    h2 = jnp.maximum(h1 @ w2.astype(f32) + b2.astype(f32), 0.0)
    return h2 @ w3_row.astype(f32).T + b3


if __name__ == "__main__":
    key = jax.random.PRNGKey(0)
    k_state, k_params = jax.random.split(key)

    batch, obs_dim, hidden1, hidden2 = 8, 32, 64, 64
    state = jax.random.normal(k_state, (batch, obs_dim), jnp.float32)
    params = init_params(k_params, obs_dim, hidden1, hidden2,
                         dtype=jnp.float32)

    q = base_critic_forward(state, params)
    q = jax.block_until_ready(q)

    q_ref = reference_forward(state, params)
    assert q.shape == (batch, 1), q.shape
    assert jnp.allclose(q, q_ref, atol=1e-5, rtol=1e-5), (
        "Pallas output mismatch vs reference")

    print("KERNEL_OK")
</pallas_src>

<mosaic_0001>
module attributes {stable_mosaic.version = 11 : i64} {
  func.func @critic_mlp_kernel(%arg0: i32, %arg1: memref<8x32xf32, #tpu.memory_space<vmem>>, %arg2: memref<32x64xf32, #tpu.memory_space<vmem>>, %arg3: memref<1x64xf32, #tpu.memory_space<vmem>>, %arg4: memref<64x64xf32, #tpu.memory_space<vmem>>, %arg5: memref<1x64xf32, #tpu.memory_space<vmem>>, %arg6: memref<1x64xf32, #tpu.memory_space<vmem>>, %arg7: memref<1x1xf32, #tpu.memory_space<smem>>, %arg8: memref<8x1xf32, #tpu.memory_space<vmem>>) attributes {dimension_semantics = [#tpu.dimension_semantics<parallel>], iteration_bounds = array<i64: 1>, scalar_prefetch = 0 : i64, scratch_operands = 0 : i64, tpu.core_type = #tpu.core_type<tc>, window_params = [{transform_indices = @transform_0, window_bounds = array<i64: 8, 32>}, {pipeline_mode = #tpu.pipeline_mode<synchronous>, transform_indices = @transform_1, window_bounds = array<i64: 32, 64>}, {pipeline_mode = #tpu.pipeline_mode<synchronous>, transform_indices = @transform_2, window_bounds = array<i64: 1, 64>}, {pipeline_mode = #tpu.pipeline_mode<synchronous>, transform_indices = @transform_3, window_bounds = array<i64: 64, 64>}, {pipeline_mode = #tpu.pipeline_mode<synchronous>, transform_indices = @transform_4, window_bounds = array<i64: 1, 64>}, {pipeline_mode = #tpu.pipeline_mode<synchronous>, transform_indices = @transform_5, window_bounds = array<i64: 1, 64>}, {transform_indices = @transform_6, window_bounds = array<i64: 1, 1>}, {transform_indices = @transform_7, window_bounds = array<i64: 8, 1>}]} {
    %c0 = arith.constant 0 : index
    %c0_0 = arith.constant 0 : index
    %0 = vector.load %arg1[%c0, %c0_0] : memref<8x32xf32, #tpu.memory_space<vmem>>, vector<8x32xf32>
    %c0_1 = arith.constant 0 : index
    %c0_2 = arith.constant 0 : index
    %1 = vector.load %arg2[%c0_1, %c0_2] : memref<32x64xf32, #tpu.memory_space<vmem>>, vector<32x64xf32>
    %cst = arith.constant dense<0.000000e+00> : vector<8x64xf32>
    %2 = tpu.matmul %0, %1, %cst {dimension_numbers = #tpu.dot_dimension_numbers<[1], [0], [0], [1], [0, 0, 1, 1], [], []>} : vector<8x32xf32>, vector<32x64xf32>, vector<8x64xf32> -> vector<8x64xf32>
    %c0_3 = arith.constant 0 : index
    %c0_4 = arith.constant 0 : index
    %3 = vector.load %arg3[%c0_3, %c0_4] : memref<1x64xf32, #tpu.memory_space<vmem>>, vector<1x64xf32>
    %4 = vector.broadcast %3 : vector<1x64xf32> to vector<8x64xf32>
    %5 = arith.addf %2, %4 : vector<8x64xf32>
    %cst_5 = arith.constant 0.000000e+00 : f32
    %6 = vector.broadcast %cst_5 : f32 to vector<8x64xf32>
    %7 = arith.maximumf %5, %6 : vector<8x64xf32>
    %c0_6 = arith.constant 0 : index
    %c0_7 = arith.constant 0 : index
    %8 = vector.load %arg4[%c0_6, %c0_7] : memref<64x64xf32, #tpu.memory_space<vmem>>, vector<64x64xf32>
    %cst_8 = arith.constant dense<0.000000e+00> : vector<8x64xf32>
    %9 = tpu.matmul %7, %8, %cst_8 {dimension_numbers = #tpu.dot_dimension_numbers<[1], [0], [0], [1], [0, 0, 1, 1], [], []>} : vector<8x64xf32>, vector<64x64xf32>, vector<8x64xf32> -> vector<8x64xf32>
    %c0_9 = arith.constant 0 : index
    %c0_10 = arith.constant 0 : index
    %10 = vector.load %arg5[%c0_9, %c0_10] : memref<1x64xf32, #tpu.memory_space<vmem>>, vector<1x64xf32>
    %11 = vector.broadcast %10 : vector<1x64xf32> to vector<8x64xf32>
    %12 = arith.addf %9, %11 : vector<8x64xf32>
    %cst_11 = arith.constant 0.000000e+00 : f32
    %13 = vector.broadcast %cst_11 : f32 to vector<8x64xf32>
    %14 = arith.maximumf %12, %13 : vector<8x64xf32>
    %c0_12 = arith.constant 0 : index
    %c0_13 = arith.constant 0 : index
    %15 = vector.load %arg6[%c0_12, %c0_13] : memref<1x64xf32, #tpu.memory_space<vmem>>, vector<1x64xf32>
    %16 = vector.broadcast %15 : vector<1x64xf32> to vector<8x64xf32>
    %17 = arith.mulf %14, %16 : vector<8x64xf32>
    %cst_14 = arith.constant dense<0.000000e+00> : vector<8xf32>
    %18 = vector.multi_reduction <add>, %17, %cst_14 [1] : vector<8x64xf32> to vector<8xf32>
    %19 = vector.shape_cast %18 : vector<8xf32> to vector<8x1xf32>
    %c0_15 = arith.constant 0 : index
    %c0_16 = arith.constant 0 : index
    %20 = memref.load %arg7[%c0_15, %c0_16] : memref<1x1xf32, #tpu.memory_space<smem>>
    %21 = vector.broadcast %20 : f32 to vector<8x1xf32>
    %22 = arith.addf %19, %21 : vector<8x1xf32>
    %c0_17 = arith.constant 0 : index
    %c0_18 = arith.constant 0 : index
    %23 = vector.load %arg8[%c0_17, %c0_18] : memref<8x1xf32, #tpu.memory_space<vmem>>, vector<8x1xf32>
    tpu.vector_store %arg8[%c0_17, %c0_18], %22 {strides = array<i32>} : memref<8x1xf32, #tpu.memory_space<vmem>>, vector<8x1xf32>,
    return
  }
  func.func @transform_0(%arg0: i32) -> (i32, i32) {
    %c0_i32 = arith.constant 0 : i32
    %c0_i32_0 = arith.constant 0 : i32
    return %arg0, %c0_i32 : i32, i32
  }
  func.func @transform_1(%arg0: i32) -> (i32, i32) {
    %c0_i32 = arith.constant 0 : i32
    %c0_i32_0 = arith.constant 0 : i32
    %c0_i32_1 = arith.constant 0 : i32
    return %c0_i32, %c0_i32_0 : i32, i32
  }
  func.func @transform_2(%arg0: i32) -> (i32, i32) {
    %c0_i32 = arith.constant 0 : i32
    %c0_i32_0 = arith.constant 0 : i32
    %c0_i32_1 = arith.constant 0 : i32
    return %c0_i32, %c0_i32_0 : i32, i32
  }
  func.func @transform_3(%arg0: i32) -> (i32, i32) {
    %c0_i32 = arith.constant 0 : i32
    %c0_i32_0 = arith.constant 0 : i32
    %c0_i32_1 = arith.constant 0 : i32
    return %c0_i32, %c0_i32_0 : i32, i32
  }
  func.func @transform_4(%arg0: i32) -> (i32, i32) {
    %c0_i32 = arith.constant 0 : i32
    %c0_i32_0 = arith.constant 0 : i32
    %c0_i32_1 = arith.constant 0 : i32
    return %c0_i32, %c0_i32_0 : i32, i32
  }
  func.func @transform_5(%arg0: i32) -> (i32, i32) {
    %c0_i32 = arith.constant 0 : i32
    %c0_i32_0 = arith.constant 0 : i32
    %c0_i32_1 = arith.constant 0 : i32
    return %c0_i32, %c0_i32_0 : i32, i32
  }
  func.func @transform_6(%arg0: i32) -> (i32, i32) {
    %c0_i32 = arith.constant 0 : i32
    %c0_i32_0 = arith.constant 0 : i32
    %c0_i32_1 = arith.constant 0 : i32
    return %c0_i32, %c0_i32_0 : i32, i32
  }
  func.func @transform_7(%arg0: i32) -> (i32, i32) {
    %c0_i32 = arith.constant 0 : i32
    %c0_i32_0 = arith.constant 0 : i32
    return %arg0, %c0_i32 : i32, i32
  }
}

</mosaic_0001>

<llo_original>
// kernel: base_critic_forward.1
$region0: #{base_critic_forward.1}
  #allocation0 [shape = 'u32[]', space=smem, size = 0x4, offset = 0x4, fixed_abs, tag = 'smem constant byte address 0x4 - core index']
  #allocation1 [shape = 'u32[72,128]{1,0:T(1,128)}', space=vmem, size = 0x9000, scoped, tag = 'internal scratch']
  #allocation2 [shape = 'f32[1,1]{1,0:T(1,128)S(6)}', space=smem, size = 0x200, scoped, tag = 'scoped memory for base_critic_forward.1']
  %s0 = inlined_call_operand.hbm [shape: f32[8,32], index: 0, kind: input, shape index: {}]
  %s1 = inlined_call_operand.hbm [shape: f32[32,64], index: 1, kind: input, shape index: {}]
  %s2 = inlined_call_operand.vmem [shape: f32[1,64], index: 2, kind: input, shape index: {}]
  %s3 = inlined_call_operand.hbm [shape: f32[64,64], index: 3, kind: input, shape index: {}]
  %s4 = inlined_call_operand.vmem [shape: f32[1,64], index: 4, kind: input, shape index: {}]
  %s5 = inlined_call_operand.vmem [shape: f32[1,64], index: 5, kind: input, shape index: {}]
  %s6 = inlined_call_operand.<no memory space> [shape: f32[1,1], index: 6, kind: input, shape index: {}]
  %s7 = inlined_call_operand.vmem [shape: f32[8,1], index: 7, kind: output, shape index: {}]
  %s8 = sld [smem:[#allocation0]]
  $region50: #{base_critic_forward.1} parent=0
    _
  %s10 = ssub.s32 1, %s8
  %s11 = scalar_select 0, %s10, %s8
  %12 = sst [smem:[#allocation2]] %s6
  $region1: #{base_critic_forward.1} parent=0
    #allocation3 [shape = 'u8[4096]{0}', space=vmem, size = 0x1000, scoped, tag = 'input window, operand 0, single buffered']
    #allocation4 [shape = 's32[1]{0}', space=sflag, size = 0x4, scoped, tag = 'scoped memory for base_critic_forward.1']
    #allocation5 [shape = 'u8[16384]{0}', space=vmem, size = 0x4000, scoped, tag = 'input window, operand 1, single buffered']
    #allocation6 [shape = 's32[1]{0}', space=sflag, size = 0x4, scoped, tag = 'scoped memory for base_critic_forward.1']
    #allocation7 [shape = 'u8[32768]{0}', space=vmem, size = 0x8000, scoped, tag = 'input window, operand 3, single buffered']
    %13 = vsyncpa [#allocation4], 0
    %14 = vsyncpa [#allocation6], 0
    // Predicated region
    $region2: #{base_critic_forward.1} parent=1 // pred_check
      _
    $region3: #{base_critic_forward.1} parent=1 // pred_check_branch
      %16 = sbr.rel (0) target = $region5
    $region4: #{base_critic_forward.1} parent=1 // pred_region
      %18 = vsyncadd [#allocation4], 0
      %s20 = sshll.u32 %s0, 4
      %s21 = int_to_ptr.hbm [resolvable:$true] %s20
      %s22 = sshll.u32 [#allocation3], 4
      %s23 = int_to_ptr.vmem [resolvable:$true] %s22
      %25 = dma.hbm_to_vmem [thread:$0]  %s21, 128, %s23, [#allocation4]
    $region5: #{base_critic_forward.1} parent=1 // pred_fallthru
      _
    // Predicated region
    $region6: #{base_critic_forward.1} parent=1 // pred_check
      _
    $region7: #{base_critic_forward.1} parent=1 // pred_check_branch
      %27 = sbr.rel (0) target = $region9
    $region8: #{base_critic_forward.1} parent=1 // pred_region
      %29 = vsyncadd [#allocation6], 0
      %s30 = sshll.u32 %s1, 4
      %s31 = int_to_ptr.hbm [resolvable:$true] %s30
      %s32 = sshll.u32 [#allocation5], 4
      %s33 = int_to_ptr.vmem [resolvable:$true] %s32
      %38 = dma.hbm_to_vmem [thread:$0]  %s31, 512, %s33, [#allocation6], 128, 128, 8
    $region9: #{base_critic_forward.1} parent=1 // pred_fallthru
      _
    // Predicated region
    $region10: #{base_critic_forward.1} parent=1 // pred_check
      _
    $region11: #{base_critic_forward.1} parent=1 // pred_check_branch
      %40 = sbr.rel (0) target = $region13
    $region12: #{base_critic_forward.1} parent=1 // pred_region
      _
    $region13: #{base_critic_forward.1} parent=1 // pred_fallthru
      _
    // Predicated region
    $region14: #{base_critic_forward.1} parent=1 // pred_check
      _
    $region15: #{base_critic_forward.1} parent=1 // pred_check_branch
      %42 = sbr.rel (0) target = $region17
    $region16: #{base_critic_forward.1} parent=1 // pred_region
      %44 = vsyncadd [#allocation6], 0
      %s45 = sshll.u32 %s3, 4
      %s46 = int_to_ptr.hbm [resolvable:$true] %s45
      %s47 = sshll.u32 [#allocation7], 4
      %s48 = int_to_ptr.vmem [resolvable:$true] %s47
      %53 = dma.hbm_to_vmem [thread:$0]  %s46, 1024, %s48, [#allocation6], 128, 128, 8
    $region17: #{base_critic_forward.1} parent=1 // pred_fallthru
      _
    // Predicated region
    $region18: #{base_critic_forward.1} parent=1 // pred_check
      _
    $region19: #{base_critic_forward.1} parent=1 // pred_check_branch
      %55 = sbr.rel (0) target = $region21
    $region20: #{base_critic_forward.1} parent=1 // pred_region
      _
    $region21: #{base_critic_forward.1} parent=1 // pred_fallthru
      _
    // Predicated region
    $region22: #{base_critic_forward.1} parent=1 // pred_check
      _
    $region23: #{base_critic_forward.1} parent=1 // pred_check_branch
      %57 = sbr.rel (0) target = $region25
    $region24: #{base_critic_forward.1} parent=1 // pred_region
      _
    $region25: #{base_critic_forward.1} parent=1 // pred_fallthru
      _
    // Predicated region
    $region26: #{base_critic_forward.1} parent=1 // pred_check
      _
    $region27: #{base_critic_forward.1} parent=1 // pred_check_branch
      %59 = sbr.rel (0) target = $region29
    $region28: #{base_critic_forward.1} parent=1 // pred_region
      _
    $region29: #{base_critic_forward.1} parent=1 // pred_fallthru
      _
    // Predicated region
    $region30: #{base_critic_forward.1} parent=1 // pred_check
      _
    $region31: #{base_critic_forward.1} parent=1 // pred_check_branch
      %61 = sbr.rel (0) target = $region33
    $region32: #{base_critic_forward.1} parent=1 // pred_region
      %63 = dma.done [#allocation4], 128
    $region33: #{base_critic_forward.1} parent=1 // pred_fallthru
      _
    // Predicated region
    $region34: #{base_critic_forward.1} parent=1 // pred_check
      _
    $region35: #{base_critic_forward.1} parent=1 // pred_check_branch
      %65 = sbr.rel (0) target = $region37
    $region36: #{base_critic_forward.1} parent=1 // pred_region
      %67 = dma.done [#allocation6], 512
    $region37: #{base_critic_forward.1} parent=1 // pred_fallthru
      _
    // Predicated region
    $region38: #{base_critic_forward.1} parent=1 // pred_check
      _
    $region39: #{base_critic_forward.1} parent=1 // pred_check_branch
      %69 = sbr.rel (0) target = $region41
    $region40: #{base_critic_forward.1} parent=1 // pred_region
      %71 = dma.done [#allocation6], 1024
    $region41: #{base_critic_forward.1} parent=1 // pred_fallthru
      _
    %v72 = vld [vmem:[#allocation3] sm:$0xff]
    %v73 = vld [vmem:[#allocation5] sm:$0xff]
    %v74 = vld [vmem:[#allocation5 + $0x8] sm:$0xff]
    %v75 = vld [vmem:[#allocation5 + $0x10] sm:$0xff]
    %v76 = vld [vmem:[#allocation5 + $0x18] sm:$0xff]
    %v77 = vld [vmem:[%s2] sm:$0x1]
    %v79 = vperm.slane %v77, 0
    %vm81 = vcmask 261120
    %v83 = vsel %vm81, %v72, 0
    %85 = vmatpush.msra.mxu0 0.0
    %86 = vmatpush.msra.mxu0 0.0
    %87 = vmatpush.msra.mxu0 0.0
    %88 = vmatpush.msra.mxu0 0.0
    %89 = vmatpush.msra.mxu0 0.0
    %90 = vmatpush.msra.mxu0 0.0
    %91 = vmatpush.msra.mxu0 0.0
    %92 = vmatpush.msra.mxu0 0.0
    %93 = vmatpush.msra.mxu0 0.0
    %94 = vmatpush.msra.mxu0 0.0
    %95 = vmatpush.msra.mxu0 0.0
    %96 = vmatpush.msra.mxu0 0.0
    %97 = vmatpush.msra.mxu0 %v76
    %98 = vmatpush.msra.mxu0 %v75
    %99 = vmatpush.msra.mxu0 %v74
    %100 = vmatpush.msra.mxu0 %v73
    %101 = vmatmul.f32.gmra.mxu0 %v83
    %v102 = vpop.f32.mrf.mxu0
    %v103 = vadd.f32 %v79, %v102
    %104 = vdwg.mxu0
    %v105 = vmax.f32 %v103, 0.0
    %v106 = vld [vmem:[#allocation7] sm:$0xff]
    %v107 = vld [vmem:[#allocation7 + $0x8] sm:$0xff]
    %v108 = vld [vmem:[#allocation7 + $0x10] sm:$0xff]
    %v109 = vld [vmem:[#allocation7 + $0x18] sm:$0xff]
    %v110 = vld [vmem:[#allocation7 + $0x20] sm:$0xff]
    %v111 = vld [vmem:[#allocation7 + $0x28] sm:$0xff]
    %v112 = vld [vmem:[#allocation7 + $0x30] sm:$0xff]
    %v113 = vld [vmem:[#allocation7 + $0x38] sm:$0xff]
    %v114 = vld [vmem:[%s4] sm:$0x1]
    %v116 = vperm.slane %v114, 0
    %vm118 = vcmask 523264
    %v120 = vsel %vm118, %v105, 0
    %122 = vmatpush.msra.mxu0 0.0
    %123 = vmatpush.msra.mxu0 0.0
    %124 = vmatpush.msra.mxu0 0.0
    %125 = vmatpush.msra.mxu0 0.0
    %126 = vmatpush.msra.mxu0 0.0
    %127 = vmatpush.msra.mxu0 0.0
    %128 = vmatpush.msra.mxu0 0.0
    %129 = vmatpush.msra.mxu0 0.0
    %130 = vmatpush.msra.mxu0 %v113
    %131 = vmatpush.msra.mxu0 %v112
    %132 = vmatpush.msra.mxu0 %v111
    %133 = vmatpush.msra.mxu0 %v110
    %134 = vmatpush.msra.mxu0 %v109
    %135 = vmatpush.msra.mxu0 %v108
    %136 = vmatpush.msra.mxu0 %v107
    %137 = vmatpush.msra.mxu0 %v106
    %138 = vmatmul.f32.gmra.mxu0 %v120
    %v139 = vpop.f32.mrf.mxu0
    %v140 = vadd.f32 %v116, %v139
    %141 = vdwg.mxu0
    %v142 = vmax.f32 %v140, 0.0
    %v143 = vld [vmem:[%s5] sm:$0x1]
    %v145 = vperm.slane %v143, 0
    %v147 = vmul.f32 %v142, %v145
    %v148 = vsel %vm118, %v147, 0.0
    %149 = vadd.xlane.f32.xlu0 %v148
    %v150 = vpop.xlane.xlu0 %149
    %s151 = sld [smem:[#allocation2]]
    %v152 = vstv %s151
    %v153 = vadd.f32 %v150, %v152
    %vm154 = vcmask 7168
    %155 = vst.msk [vmem:[%s7] sm:$0xff] %vm154, %v153
    // Predicated region
    $region42: #{base_critic_forward.1} parent=1 // pred_check
      _
    $region43: #{base_critic_forward.1} parent=1 // pred_check_branch
      %157 = sbr.rel (0) target = $region45
    $region44: #{base_critic_forward.1} parent=1 // pred_region
      _
    $region45: #{base_critic_forward.1} parent=1 // pred_fallthru
      _
    // Predicated region
    $region46: #{base_critic_forward.1} parent=1 // pred_check
      _
    $region47: #{base_critic_forward.1} parent=1 // pred_check_branch
      %159 = sbr.rel (0) target = $region49
    $region48: #{base_critic_forward.1} parent=1 // pred_region
      _
    $region49: #{base_critic_forward.1} parent=1 // pred_fallthru
      _
    %160 = vsyncpa [#allocation4], 1
    %161 = vsyncpa [#allocation6], 1

</llo_original>
